<compile_context>
chip_gen: v7x
topology: tpu7x:2x2x1
jax: 0.10.0
libtpu: 0.0.40
codegen_flags: <defaults>
</compile_context>

<pallas_src>
import jax
import jax.numpy as jnp
from jax.experimental import pallas as pl
from jax.experimental.pallas import tpu as pltpu


def _round_up(v: int, m: int) -> int:
    return (v + m - 1) // m * m


def _mlp_kernel(x_ref, w1_ref, b1_ref, w2_ref, b2_ref, o_ref):
    # x_ref:  (TM, obs)
    # w1_ref: (obs, 128),   b1_ref: (1, 128)
    # w2_ref: (128, n_pad), b2_ref: (1, n_pad)
    # o_ref:  (TM, n_pad)
    h = jnp.dot(x_ref[...], w1_ref[...], preferred_element_type=jnp.float32)
    h = jnp.maximum(h + b1_ref[...], 0.0)          # bias + ReLU on the f32 accumulator
    out = jnp.dot(h, w2_ref[...], preferred_element_type=jnp.float32)
    o_ref[...] = (out + b2_ref[...]).astype(o_ref.dtype)


@jax.jit
def _net_forward_batched(x, w1, b1, w2, b2):
    batch, obs = x.shape
    hidden = w1.shape[1]
    n_actions = w2.shape[1]

    # Lane-dense output width (pad 8 -> 128); zero weight/bias columns don't change results.
    n_pad = _round_up(n_actions, 128)
    # Batch tile: multiple of 8 (f32 sublane), capped at 512 (amortizes grid-step
    # overhead, still trivially VMEM-safe even on v7x's 64 MiB VMEM).
    tm = min(512, _round_up(batch, 8))
    b_pad = _round_up(batch, tm)

    if b_pad != batch:
        x = jnp.pad(x, ((0, b_pad - batch), (0, 0)))
    if n_pad != n_actions:
        w2 = jnp.pad(w2, ((0, 0), (0, n_pad - n_actions)))
        b2 = jnp.pad(b2, ((0, 0), (0, n_pad - n_actions)))

    grid = (b_pad // tm,)

    flops = 2 * b_pad * obs * hidden + 2 * b_pad * hidden * n_pad
    bytes_accessed = 4 * (b_pad * obs + obs * hidden + hidden
                          + hidden * n_pad + n_pad + b_pad * n_pad)

    out = pl.pallas_call(
        _mlp_kernel,
        out_shape=jax.ShapeDtypeStruct((b_pad, n_pad), x.dtype),
        grid_spec=pltpu.PrefetchScalarGridSpec(
            num_scalar_prefetch=0,
            grid=grid,
            in_specs=[
                pl.BlockSpec((tm, obs), lambda i: (i, 0)),        # x: batch-tiled
                pl.BlockSpec((obs, hidden), lambda i: (0, 0)),    # W1: VMEM-resident
                pl.BlockSpec((1, hidden), lambda i: (0, 0)),      # b1: VMEM-resident
                pl.BlockSpec((hidden, n_pad), lambda i: (0, 0)),  # W2: VMEM-resident
                pl.BlockSpec((1, n_pad), lambda i: (0, 0)),       # b2: VMEM-resident
            ],
            out_specs=pl.BlockSpec((tm, n_pad), lambda i: (i, 0)),
        ),
        compiler_params=pltpu.CompilerParams(
            dimension_semantics=("parallel",)),
        cost_estimate=pl.CostEstimate(
            flops=flops, transcendentals=0, bytes_accessed=bytes_accessed),
    )(x, w1, b1, w2, b2)

    return out[:batch, :n_actions]


def net_forward(x, params):
    """Reproduces Net.forward: handles unbatched (1-D) inputs like the PyTorch module."""
    w1, b1, w2, b2 = params
    unbatched = x.ndim == 1
    if unbatched:
        x = x[None, :]
    out = _net_forward_batched(x, w1, b1, w2, b2)
    if unbatched:
        out = out[0]
    return out


def init_params(obs_size, n_actions, hidden=128, dtype=jnp.float32):
    """Deterministic init mimicking nn.Linear's uniform(-1/sqrt(fan_in), 1/sqrt(fan_in))."""
    key = jax.random.PRNGKey(0)
    k1, k2, k3, k4 = jax.random.split(key, 4)
    bound1 = 1.0 / jnp.sqrt(obs_size)
    bound2 = 1.0 / jnp.sqrt(hidden)
    w1 = jax.random.uniform(k1, (obs_size, hidden), dtype, -bound1, bound1)
    b1 = jax.random.uniform(k2, (1, hidden), dtype, -bound1, bound1)
    w2 = jax.random.uniform(k3, (hidden, n_actions), dtype, -bound2, bound2)
    b2 = jax.random.uniform(k4, (1, n_actions), dtype, -bound2, bound2)
    return w1, b1, w2, b2


def _reference(x, params):
    w1, b1, w2, b2 = params
    unbatched = x.ndim == 1
    if unbatched:
        x = x[None, :]
    h = jnp.maximum(x @ w1 + b1, 0.0)
    out = h @ w2 + b2
    return out[0] if unbatched else out


if __name__ == "__main__":
    obs_size, n_actions, batch = 32, 8, 2
    params = init_params(obs_size, n_actions)

    key = jax.random.PRNGKey(0)
    kx, ku, kb = jax.random.split(key, 3)
    x_batched = jax.random.normal(kx, (batch, obs_size), jnp.float32)
    x_unbatched = jax.random.normal(ku, (obs_size,), jnp.float32)
    # Larger batch exercising grid > 1 tile plus batch padding (600 -> 2 tiles of 512).
    x_big = jax.random.normal(kb, (600, obs_size), jnp.float32)

    out_b = net_forward(x_batched, params)
    out_u = net_forward(x_unbatched, params)
    out_big = net_forward(x_big, params)
    jax.block_until_ready((out_b, out_u, out_big))

    assert out_b.shape == (batch, n_actions)
    assert out_u.shape == (n_actions,)
    assert out_big.shape == (600, n_actions)

    ref_b = _reference(x_batched, params)
    ref_u = _reference(x_unbatched, params)
    ref_big = _reference(x_big, params)
    assert jnp.allclose(out_b, ref_b, atol=1e-5, rtol=1e-5)
    assert jnp.allclose(out_u, ref_u, atol=1e-5, rtol=1e-5)
    assert jnp.allclose(out_big, ref_big, atol=1e-5, rtol=1e-5)

    print("KERNEL_OK")
</pallas_src>

<mosaic_0001>
module attributes {stable_mosaic.version = 11 : i64} {
  func.func @_mlp_kernel(%arg0: i32, %arg1: memref<8x32xf32, #tpu.memory_space<vmem>>, %arg2: memref<32x128xf32, #tpu.memory_space<vmem>>, %arg3: memref<1x128xf32, #tpu.memory_space<vmem>>, %arg4: memref<128x128xf32, #tpu.memory_space<vmem>>, %arg5: memref<1x128xf32, #tpu.memory_space<vmem>>, %arg6: memref<8x128xf32, #tpu.memory_space<vmem>>) attributes {dimension_semantics = [#tpu.dimension_semantics<parallel>], iteration_bounds = array<i64: 1>, scalar_prefetch = 0 : i64, scratch_operands = 0 : i64, tpu.core_type = #tpu.core_type<tc>, window_params = [{transform_indices = @transform_0, window_bounds = array<i64: 8, 32>}, {pipeline_mode = #tpu.pipeline_mode<synchronous>, transform_indices = @transform_1, window_bounds = array<i64: 32, 128>}, {pipeline_mode = #tpu.pipeline_mode<synchronous>, transform_indices = @transform_2, window_bounds = array<i64: 1, 128>}, {pipeline_mode = #tpu.pipeline_mode<synchronous>, transform_indices = @transform_3, window_bounds = array<i64: 128, 128>}, {pipeline_mode = #tpu.pipeline_mode<synchronous>, transform_indices = @transform_4, window_bounds = array<i64: 1, 128>}, {transform_indices = @transform_5, window_bounds = array<i64: 8, 128>}]} {
    %c0 = arith.constant 0 : index
    %c0_0 = arith.constant 0 : index
    %0 = vector.load %arg1[%c0, %c0_0] : memref<8x32xf32, #tpu.memory_space<vmem>>, vector<8x32xf32>
    %c0_1 = arith.constant 0 : index
    %c0_2 = arith.constant 0 : index
    %1 = vector.load %arg2[%c0_1, %c0_2] : memref<32x128xf32, #tpu.memory_space<vmem>>, vector<32x128xf32>
    %cst = arith.constant dense<0.000000e+00> : vector<8x128xf32>
    %2 = tpu.matmul %0, %1, %cst {dimension_numbers = #tpu.dot_dimension_numbers<[1], [0], [0], [1], [0, 0, 1, 1], [], []>} : vector<8x32xf32>, vector<32x128xf32>, vector<8x128xf32> -> vector<8x128xf32>
    %c0_3 = arith.constant 0 : index
    %c0_4 = arith.constant 0 : index
    %3 = vector.load %arg3[%c0_3, %c0_4] : memref<1x128xf32, #tpu.memory_space<vmem>>, vector<1x128xf32>
    %4 = vector.broadcast %3 : vector<1x128xf32> to vector<8x128xf32>
    %5 = arith.addf %2, %4 : vector<8x128xf32>
    %cst_5 = arith.constant 0.000000e+00 : f32
    %6 = vector.broadcast %cst_5 : f32 to vector<8x128xf32>
    %7 = arith.maximumf %5, %6 : vector<8x128xf32>
    %c0_6 = arith.constant 0 : index
    %c0_7 = arith.constant 0 : index
    %8 = vector.load %arg4[%c0_6, %c0_7] : memref<128x128xf32, #tpu.memory_space<vmem>>, vector<128x128xf32>
    %cst_8 = arith.constant dense<0.000000e+00> : vector<8x128xf32>
    %9 = tpu.matmul %7, %8, %cst_8 {dimension_numbers = #tpu.dot_dimension_numbers<[1], [0], [0], [1], [0, 0, 1, 1], [], []>} : vector<8x128xf32>, vector<128x128xf32>, vector<8x128xf32> -> vector<8x128xf32>
    %c0_9 = arith.constant 0 : index
    %c0_10 = arith.constant 0 : index
    %10 = vector.load %arg5[%c0_9, %c0_10] : memref<1x128xf32, #tpu.memory_space<vmem>>, vector<1x128xf32>
    %11 = vector.broadcast %10 : vector<1x128xf32> to vector<8x128xf32>
    %12 = arith.addf %9, %11 : vector<8x128xf32>
    %c0_11 = arith.constant 0 : index
    %c0_12 = arith.constant 0 : index
    %13 = vector.load %arg6[%c0_11, %c0_12] : memref<8x128xf32, #tpu.memory_space<vmem>>, vector<8x128xf32>
    tpu.vector_store %arg6[%c0_11, %c0_12], %12 {strides = array<i32>} : memref<8x128xf32, #tpu.memory_space<vmem>>, vector<8x128xf32>,
    return
  }
  func.func @transform_0(%arg0: i32) -> (i32, i32) {
    %c0_i32 = arith.constant 0 : i32
    %c0_i32_0 = arith.constant 0 : i32
    return %arg0, %c0_i32 : i32, i32
  }
  func.func @transform_1(%arg0: i32) -> (i32, i32) {
    %c0_i32 = arith.constant 0 : i32
    %c0_i32_0 = arith.constant 0 : i32
    %c0_i32_1 = arith.constant 0 : i32
    return %c0_i32, %c0_i32_0 : i32, i32
  }
  func.func @transform_2(%arg0: i32) -> (i32, i32) {
    %c0_i32 = arith.constant 0 : i32
    %c0_i32_0 = arith.constant 0 : i32
    %c0_i32_1 = arith.constant 0 : i32
    return %c0_i32, %c0_i32_0 : i32, i32
  }
  func.func @transform_3(%arg0: i32) -> (i32, i32) {
    %c0_i32 = arith.constant 0 : i32
    %c0_i32_0 = arith.constant 0 : i32
    %c0_i32_1 = arith.constant 0 : i32
    return %c0_i32, %c0_i32_0 : i32, i32
  }
  func.func @transform_4(%arg0: i32) -> (i32, i32) {
    %c0_i32 = arith.constant 0 : i32
    %c0_i32_0 = arith.constant 0 : i32
    %c0_i32_1 = arith.constant 0 : i32
    return %c0_i32, %c0_i32_0 : i32, i32
  }
  func.func @transform_5(%arg0: i32) -> (i32, i32) {
    %c0_i32 = arith.constant 0 : i32
    %c0_i32_0 = arith.constant 0 : i32
    return %arg0, %c0_i32 : i32, i32
  }
}

</mosaic_0001>

<llo_original>
// kernel: _net_forward_batched.1
$region0: #{_net_forward_batched.1}
  #allocation0 [shape = 'u32[]', space=smem, size = 0x4, offset = 0x4, fixed_abs, tag = 'smem constant byte address 0x4 - core index']
  #allocation1 [shape = 'u32[144,128]{1,0:T(1,128)}', space=vmem, size = 0x12000, scoped, tag = 'internal scratch']
  %s0 = inlined_call_operand.vmem [shape: f32[8,32], index: 0, kind: input, shape index: {}]
  %s1 = inlined_call_operand.vmem [shape: f32[32,128], index: 1, kind: input, shape index: {}]
  %s2 = inlined_call_operand.vmem [shape: f32[1,128], index: 2, kind: input, shape index: {}]
  %s3 = inlined_call_operand.vmem [shape: f32[128,128], index: 3, kind: input, shape index: {}]
  %s4 = inlined_call_operand.vmem [shape: f32[1,128], index: 4, kind: input, shape index: {}]
  %s5 = inlined_call_operand.vmem [shape: f32[8,128], index: 5, kind: output, shape index: {}]
  %s6 = sld [smem:[#allocation0]]
  $region30: #{_net_forward_batched.1} parent=0
    _
  %s8 = ssub.s32 1, %s6
  %s9 = scalar_select 0, %s8, %s6
  // Predicated region
  $region2: #{_net_forward_batched.1} parent=0 // pred_check
    _
  $region3: #{_net_forward_batched.1} parent=0 // pred_check_branch
    %11 = sbr.rel (0) target = $region5
  $region4: #{_net_forward_batched.1} parent=0 // pred_region
    _
  $region5: #{_net_forward_batched.1} parent=0 // pred_fallthru
    _
  // Predicated region
  $region6: #{_net_forward_batched.1} parent=0 // pred_check
    _
  $region7: #{_net_forward_batched.1} parent=0 // pred_check_branch
    %13 = sbr.rel (0) target = $region9
  $region8: #{_net_forward_batched.1} parent=0 // pred_region
    _
  $region9: #{_net_forward_batched.1} parent=0 // pred_fallthru
    _
  // Predicated region
  $region10: #{_net_forward_batched.1} parent=0 // pred_check
    _
  $region11: #{_net_forward_batched.1} parent=0 // pred_check_branch
    %15 = sbr.rel (0) target = $region13
  $region12: #{_net_forward_batched.1} parent=0 // pred_region
    _
  $region13: #{_net_forward_batched.1} parent=0 // pred_fallthru
    _
  // Predicated region
  $region14: #{_net_forward_batched.1} parent=0 // pred_check
    _
  $region15: #{_net_forward_batched.1} parent=0 // pred_check_branch
    %17 = sbr.rel (0) target = $region17
  $region16: #{_net_forward_batched.1} parent=0 // pred_region
    _
  $region17: #{_net_forward_batched.1} parent=0 // pred_fallthru
    _
  // Predicated region
  $region18: #{_net_forward_batched.1} parent=0 // pred_check
    _
  $region19: #{_net_forward_batched.1} parent=0 // pred_check_branch
    %19 = sbr.rel (0) target = $region21
  $region20: #{_net_forward_batched.1} parent=0 // pred_region
    _
  $region21: #{_net_forward_batched.1} parent=0 // pred_fallthru
    _
  %v20 = vld [vmem:[%s0] sm:$0xff]
  %v21 = vld [vmem:[%s1] sm:$0xff]
  %v22 = vld [vmem:[%s1 + $0x8] sm:$0xff]
  %v23 = vld [vmem:[%s1 + $0x10] sm:$0xff]
  %v24 = vld [vmem:[%s1 + $0x18] sm:$0xff]
  %v25 = vld [vmem:[%s2] sm:$0x1]
  %v27 = vlaneseq
  %v28 = vshrl.u32 %v27, 7
  %v29 = vsub.s32 0, %v28
  %v30 = vrot.slane %v25, %v29
  %vm32 = vcmask 261120
  %v34 = vsel %vm32, %v20, 0
  %36 = vmatprep.subr.mxu0 0.0
  %37 = vmatpush1.msra.mxu0 %v21
  %38 = vmatprep.subr.mxu0 0.0
  %39 = vmatpush1.msra.mxu0 %v22
  %40 = vmatprep.subr.mxu0 0.0
  %41 = vmatpush1.msra.mxu0 %v23
  %42 = vmatprep.subr.mxu0 0.0
  %43 = vmatpush1.msra.mxu0 %v24
  %44 = vmatprep.subr.mxu0 0.0
  %45 = vmatpush1.msra.mxu0 0.0
  %46 = vmatprep.subr.mxu0 0.0
  %47 = vmatpush1.msra.mxu0 0.0
  %48 = vmatprep.subr.mxu0 0.0
  %49 = vmatpush1.msra.mxu0 0.0
  %50 = vmatprep.subr.mxu0 0.0
  %51 = vmatpush1.msra.mxu0 0.0
  %52 = vmatprep.subr.mxu0 0.0
  %53 = vmatpush1.msra.mxu0 0.0
  %54 = vmatprep.subr.mxu0 0.0
  %55 = vmatpush1.msra.mxu0 0.0
  %56 = vmatprep.subr.mxu0 0.0
  %57 = vmatpush1.msra.mxu0 0.0
  %58 = vmatprep.subr.mxu0 0.0
  %59 = vmatpush1.msra.mxu0 0.0
  %60 = vmatprep.subr.mxu0 0.0
  %61 = vmatpush1.msra.mxu0 0.0
  %62 = vmatprep.subr.mxu0 0.0
  %63 = vmatpush1.msra.mxu0 0.0
  %64 = vmatprep.subr.mxu0 0.0
  %65 = vmatpush1.msra.mxu0 0.0
  %66 = vmatprep.subr.mxu0 0.0
  %67 = vmatpush1.msra.mxu0 0.0
  %68 = vmatprep.subr.mxu0 0.0
  %69 = vmatpush1.msra.mxu0 0.0
  %70 = vmatprep.subr.mxu0 0.0
  %71 = vmatpush1.msra.mxu0 0.0
  %72 = vmatprep.subr.mxu0 0.0
  %73 = vmatpush1.msra.mxu0 0.0
  %74 = vmatprep.subr.mxu0 0.0
  %75 = vmatpush1.msra.mxu0 0.0
  %76 = vmatprep.subr.mxu0 0.0
  %77 = vmatpush1.msra.mxu0 0.0
  %78 = vmatprep.subr.mxu0 0.0
  %79 = vmatpush1.msra.mxu0 0.0
  %80 = vmatprep.subr.mxu0 0.0
  %81 = vmatpush1.msra.mxu0 0.0
  %82 = vmatprep.subr.mxu0 0.0
  %83 = vmatpush1.msra.mxu0 0.0
  %84 = vmatprep.subr.mxu0 0.0
  %85 = vmatpush1.msra.mxu0 0.0
  %86 = vmatprep.subr.mxu0 0.0
  %87 = vmatpush1.msra.mxu0 0.0
  %88 = vmatprep.subr.mxu0 0.0
  %89 = vmatpush1.msra.mxu0 0.0
  %90 = vmatprep.subr.mxu0 0.0
  %91 = vmatpush1.msra.mxu0 0.0
  %92 = vmatprep.subr.mxu0 0.0
  %93 = vmatpush1.msra.mxu0 0.0
  %94 = vmatprep.subr.mxu0 0.0
  %95 = vmatpush1.msra.mxu0 0.0
  %96 = vmatprep.subr.mxu0 0.0
  %97 = vmatpush1.msra.mxu0 0.0
  %98 = vmatprep.subr.mxu0 0.0
  %99 = vmatpush1.msra.mxu0 0.0
  %100 = vmatprep.mubr.f32.mxu0 0.0
  %101 = vmatmul.mubr.f32.gmra.mrb[0].mxu0 %v34
  %v102 = vpop.f32.mrb[0].mxu0
  %v103 = vadd.f32 %v30, %v102
  %v104 = vpop.f32.mrb[0].mxu0
  %105 = vdwg.mxu0
  %v106 = vmax.f32 %v103, 0.0
  %v107 = vld [vmem:[%s3] sm:$0xff]
  %v108 = vld [vmem:[%s3 + $0x8] sm:$0xff]
  %v109 = vld [vmem:[%s3 + $0x10] sm:$0xff]
  %v110 = vld [vmem:[%s3 + $0x18] sm:$0xff]
  %v111 = vld [vmem:[%s3 + $0x20] sm:$0xff]
  %v112 = vld [vmem:[%s3 + $0x28] sm:$0xff]
  %v113 = vld [vmem:[%s3 + $0x30] sm:$0xff]
  %v114 = vld [vmem:[%s3 + $0x38] sm:$0xff]
  %v115 = vld [vmem:[%s3 + $0x40] sm:$0xff]
  %v116 = vld [vmem:[%s3 + $0x48] sm:$0xff]
  %v117 = vld [vmem:[%s3 + $0x50] sm:$0xff]
  %v118 = vld [vmem:[%s3 + $0x58] sm:$0xff]
  %v119 = vld [vmem:[%s3 + $0x60] sm:$0xff]
  %v120 = vld [vmem:[%s3 + $0x68] sm:$0xff]
  %v121 = vld [vmem:[%s3 + $0x70] sm:$0xff]
  %v122 = vld [vmem:[%s3 + $0x78] sm:$0xff]
  %v123 = vld [vmem:[%s4] sm:$0x1]
  %v125 = vlaneseq
  %v126 = vshrl.u32 %v125, 7
  %v127 = vsub.s32 0, %v126
  %v128 = vrot.slane %v123, %v127
  %130 = vmatprep.subr.mxu0 0.0
  %131 = vmatpush1.msra.mxu0 %v107
  %132 = vmatprep.subr.mxu0 0.0
  %133 = vmatpush1.msra.mxu0 %v108
  %134 = vmatprep.subr.mxu0 0.0
  %135 = vmatpush1.msra.mxu0 %v109
  %136 = vmatprep.subr.mxu0 0.0
  %137 = vmatpush1.msra.mxu0 %v110
  %138 = vmatprep.subr.mxu0 0.0
  %139 = vmatpush1.msra.mxu0 %v111
  %140 = vmatprep.subr.mxu0 0.0
  %141 = vmatpush1.msra.mxu0 %v112
  %142 = vmatprep.subr.mxu0 0.0
  %143 = vmatpush1.msra.mxu0 %v113
  %144 = vmatprep.subr.mxu0 0.0
  %145 = vmatpush1.msra.mxu0 %v114
  %146 = vmatprep.subr.mxu0 0.0
  %147 = vmatpush1.msra.mxu0 %v115
  %148 = vmatprep.subr.mxu0 0.0
  %149 = vmatpush1.msra.mxu0 %v116
  %150 = vmatprep.subr.mxu0 0.0
  %151 = vmatpush1.msra.mxu0 %v117
  %152 = vmatprep.subr.mxu0 0.0
  %153 = vmatpush1.msra.mxu0 %v118
  %154 = vmatprep.subr.mxu0 0.0
  %155 = vmatpush1.msra.mxu0 %v119
  %156 = vmatprep.subr.mxu0 0.0
  %157 = vmatpush1.msra.mxu0 %v120
  %158 = vmatprep.subr.mxu0 0.0
  %159 = vmatpush1.msra.mxu0 %v121
  %160 = vmatprep.subr.mxu0 0.0
  %161 = vmatpush1.msra.mxu0 %v122
  %162 = vmatprep.subr.mxu0 0.0
  %163 = vmatpush1.msra.mxu0 0.0
  %164 = vmatprep.subr.mxu0 0.0
  %165 = vmatpush1.msra.mxu0 0.0
  %166 = vmatprep.subr.mxu0 0.0
  %167 = vmatpush1.msra.mxu0 0.0
  %168 = vmatprep.subr.mxu0 0.0
  %169 = vmatpush1.msra.mxu0 0.0
  %170 = vmatprep.subr.mxu0 0.0
  %171 = vmatpush1.msra.mxu0 0.0
  %172 = vmatprep.subr.mxu0 0.0
  %173 = vmatpush1.msra.mxu0 0.0
  %174 = vmatprep.subr.mxu0 0.0
  %175 = vmatpush1.msra.mxu0 0.0
  %176 = vmatprep.subr.mxu0 0.0
  %177 = vmatpush1.msra.mxu0 0.0
  %178 = vmatprep.subr.mxu0 0.0
  %179 = vmatpush1.msra.mxu0 0.0
  %180 = vmatprep.subr.mxu0 0.0
  %181 = vmatpush1.msra.mxu0 0.0
  %182 = vmatprep.subr.mxu0 0.0
  %183 = vmatpush1.msra.mxu0 0.0
  %184 = vmatprep.subr.mxu0 0.0
  %185 = vmatpush1.msra.mxu0 0.0
  %186 = vmatprep.subr.mxu0 0.0
  %187 = vmatpush1.msra.mxu0 0.0
  %188 = vmatprep.subr.mxu0 0.0
  %189 = vmatpush1.msra.mxu0 0.0
  %190 = vmatprep.subr.mxu0 0.0
  %191 = vmatpush1.msra.mxu0 0.0
  %192 = vmatprep.subr.mxu0 0.0
  %193 = vmatpush1.msra.mxu0 0.0
  %194 = vmatprep.mubr.f32.mxu0 0.0
  %195 = vmatmul.mubr.f32.gmra.mrb[0].mxu0 %v106
  %v196 = vpop.f32.mrb[0].mxu0
  %v197 = vadd.f32 %v128, %v196
  %v198 = vpop.f32.mrb[0].mxu0
  %199 = vdwg.mxu0
  %200 = vst [vmem:[%s5] sm:$0xff] %v197
  // Predicated region
  $region22: #{_net_forward_batched.1} parent=0 // pred_check
    _
  $region23: #{_net_forward_batched.1} parent=0 // pred_check_branch
    %202 = sbr.rel (0) target = $region25
  $region24: #{_net_forward_batched.1} parent=0 // pred_region
    _
  $region25: #{_net_forward_batched.1} parent=0 // pred_fallthru
    _
  // Predicated region
  $region26: #{_net_forward_batched.1} parent=0 // pred_check
    _
  $region27: #{_net_forward_batched.1} parent=0 // pred_check_branch
    %204 = sbr.rel (0) target = $region29
  $region28: #{_net_forward_batched.1} parent=0 // pred_region
    _
  $region29: #{_net_forward_batched.1} parent=0 // pred_fallthru
    _

</llo_original>
